<compile_context>
chip_gen: v6e
topology: v6e:2x2x1
jax: 0.10.0
libtpu: 0.0.40
codegen_flags: <defaults>
</compile_context>

<pallas_src>
import jax
import jax.numpy as jnp
from jax.experimental import pallas as pl
from jax.experimental.pallas import tpu as pltpu


def lassonet_kernel(xT_ref, w0_ref, b0_ref, skip_ref, w1_ref, b1_ref, outT_ref):
    """Whole-network forward on one transposed batch tile (batch on lanes).

    xT_ref   : (D_in, TB)    activations, batch on the 128-lane axis
    w0_ref   : (D_h, D_in)   first hidden layer weight (PyTorch layout)
    b0_ref   : (D_h, 1)      first hidden layer bias (f32)
    skip_ref : (D_out, D_in) skip connection weight (no bias)
    w1_ref   : (D_out, D_h)  last layer weight
    b1_ref   : (D_out, 1)    last layer bias (f32)
    outT_ref : (D_out, TB)   output tile, lane-dense store
    """
    xT = xT_ref[...]

    # Hidden layer 0 + ReLU; bias broadcasts along the lane (batch) axis.
    h = jnp.maximum(
        jnp.dot(w0_ref[...], xT, preferred_element_type=jnp.float32) + b0_ref[...],
        0.0,
    )

    # Last layer + skip path + bias fused into one f32 epilogue before the single
    # lane-dense store of the (D_out, TB) tile.
    outT_ref[...] = (
        jnp.dot(w1_ref[...], h.astype(w1_ref.dtype),
                preferred_element_type=jnp.float32)
        + jnp.dot(skip_ref[...], xT, preferred_element_type=jnp.float32)
        + b1_ref[...]
    ).astype(outT_ref.dtype)


def _pick_batch_tile(batch, tb):
    """Lane-aligned batch tile; >= 2 grid steps for large batches (v7x has 2 TCs)."""
    if batch <= 256:
        return batch                         # single step; block == full dim is legal
    half = max(128, (batch // 2) // 128 * 128)
    return min(tb, half)


def lassonet_forward(x, skip_w, w0, b0, w1, b1, *, tb=1024, use_bf16=False):
    """Pallas forward.

    x: (B, D_in); skip_w: (D_out, D_in); w0: (D_h, D_in); b0: (D_h,);
    w1: (D_out, D_h); b1: (D_out,)   -- PyTorch nn.Linear layouts.
    Returns (B, D_out) float32.
    """
    B, D_in = x.shape
    D_h = w0.shape[0]
    D_out = skip_w.shape[0]

    # Lane-dense layout: batch on lanes.  One transpose each way in the wrapper.
    cdt = jnp.bfloat16 if use_bf16 else x.dtype
    xT = x.T.astype(cdt)                                   # (D_in, B)
    w0c = w0.astype(cdt)
    skipc = skip_w.astype(cdt)
    w1c = w1.astype(cdt)
    b0c = b0.reshape(D_h, 1).astype(jnp.float32)           # biases stay f32
    b1c = b1.reshape(D_out, 1).astype(jnp.float32)

    TB = _pick_batch_tile(B, tb)
    grid = (pl.cdiv(B, TB),)

    # Advisory cost hint: lets XLA schedule neighbours around this latency-bound call.
    isz = jnp.dtype(cdt).itemsize
    cost = pl.CostEstimate(
        flops=2 * B * (D_in * D_h + D_h * D_out + D_in * D_out),
        transcendentals=0,
        bytes_accessed=(B * D_in * isz + B * D_out * 4
                        + (D_h * D_in + D_out * D_in + D_out * D_h) * isz
                        + (D_h + D_out) * 4),
    )

    def build(single_buffer_weights):
        def replicated(shape):
            if single_buffer_weights:
                # Grid-invariant operand: one VMEM buffer is enough.
                return pl.BlockSpec(shape, lambda i: (0, 0),
                                    pipeline_mode=pl.Buffered(1))
            return pl.BlockSpec(shape, lambda i: (0, 0))

        return pl.pallas_call(
            lassonet_kernel,
            out_shape=jax.ShapeDtypeStruct((D_out, B), jnp.float32),
            grid_spec=pltpu.PrefetchScalarGridSpec(
                num_scalar_prefetch=0,
                grid=grid,
                in_specs=[
                    pl.BlockSpec((D_in, TB), lambda i: (0, i)),   # x^T: batch-tiled
                    replicated((D_h, D_in)),                      # w0 (VMEM-resident)
                    replicated((D_h, 1)),                         # b0
                    replicated((D_out, D_in)),                    # skip_w
                    replicated((D_out, D_h)),                     # w1
                    replicated((D_out, 1)),                       # b1
                ],
                out_specs=pl.BlockSpec((D_out, TB), lambda i: (0, i)),
            ),
            compiler_params=pltpu.CompilerParams(
                # Batch axis is embarrassingly parallel -> sharded across the two
                # TensorCores on v7x.  VMEM use is only a few MiB at these dims,
                # so the default scoped vmem limit is left untouched.
                # TODO(synk): at production widths add a K/N grid axis ("arbitrary")
                # with an f32 VMEM accumulator and set vmem_limit_bytes explicitly
                # (v7x has 64 MiB physical / 32 MiB default scoped VMEM per TC).
                dimension_semantics=("parallel",),
            ),
            cost_estimate=cost,
        )

    args = (xT, w0c, b0c, skipc, w1c, b1c)
    try:
        outT = build(single_buffer_weights=True)(*args)
    except Exception:
        # pl.Buffered(1) not accepted by this jax/libtpu: fall back to the default
        # double-buffered specs (semantics identical, slightly more VMEM).
        outT = build(single_buffer_weights=False)(*args)

    return outT.T                                           # back to (B, D_out)


def reference_forward(x, skip_w, w0, b0, w1, b1):
    """Pure-JAX reference mirroring the PyTorch module (eval mode, no dropout)."""
    result = x @ skip_w.T
    h = jnp.maximum(x @ w0.T + b0, 0.0)
    y = h @ w1.T + b1
    return result + y


if __name__ == "__main__":
    # Model(dims=(16, 32, 8)), dropout=None -> layers: 16->32 (relu), 32->8; skip: 16->8.
    B, D_in, D_h, D_out = 8, 16, 32, 8

    key = jax.random.PRNGKey(0)
    kx, ks, kw0, kb0, kw1, kb1, kx2 = jax.random.split(key, 7)

    x = jax.random.normal(kx, (B, D_in), dtype=jnp.float32)

    # PyTorch nn.Linear init: U(-1/sqrt(fan_in), 1/sqrt(fan_in)); W is (out, in).
    def linear_init(kw, kb, fan_in, fan_out, bias=True):
        bound = 1.0 / (fan_in ** 0.5)
        w = jax.random.uniform(kw, (fan_out, fan_in), jnp.float32, -bound, bound)
        b = (jax.random.uniform(kb, (fan_out,), jnp.float32, -bound, bound)
             if bias else None)
        return w, b

    skip_w, _ = linear_init(ks, ks, D_in, D_out, bias=False)
    w0, b0 = linear_init(kw0, kb0, D_in, D_h)
    w1, b1 = linear_init(kw1, kb1, D_h, D_out)

    ref = reference_forward(x, skip_w, w0, b0, w1, b1)

    # Small-shape check (single grid step, f32).
    out = jax.block_until_ready(lassonet_forward(x, skip_w, w0, b0, w1, b1))
    assert out.shape == (B, D_out)
    assert jnp.allclose(out, ref, atol=1e-5, rtol=1e-5), \
        "Pallas kernel mismatch vs reference (small batch, f32)"

    # Tiled / pipelined path: TB=1024 -> grid of 2 steps, so both v7x TCs get work.
    B2 = 2048
    x2 = jax.random.normal(kx2, (B2, D_in), dtype=jnp.float32)
    out2 = jax.block_until_ready(lassonet_forward(x2, skip_w, w0, b0, w1, b1))
    ref2 = reference_forward(x2, skip_w, w0, b0, w1, b1)
    assert out2.shape == (B2, D_out)
    assert jnp.allclose(out2, ref2, atol=1e-5, rtol=1e-5), \
        "Pallas kernel mismatch vs reference (tiled batch, f32)"

    # bf16 operand path (v6e/v7x MXU-native); f32 accumulation, looser tolerance.
    out_bf16 = jax.block_until_ready(
        lassonet_forward(x, skip_w, w0, b0, w1, b1, use_bf16=True))
    assert jnp.allclose(out_bf16, ref, atol=5e-2, rtol=5e-2), \
        "Pallas kernel mismatch vs reference (bf16 operands)"

    # TODO(synk): prox(), soft_threshold(), sign_binary(), l1_regularisation_skip(),
    # input_mask(), selected_count() are training-time weight-update utilities (not
    # part of forward); dropout is None in eval mode -> not implemented as kernels.
    print("KERNEL_OK")
</pallas_src>

<mosaic_0001>
module attributes {stable_mosaic.version = 11 : i64} {
  func.func @lassonet_kernel(%arg0: i32, %arg1: memref<16x8xf32, #tpu.memory_space<vmem>>, %arg2: memref<32x16xf32, #tpu.memory_space<vmem>>, %arg3: memref<32x1xf32, #tpu.memory_space<vmem>>, %arg4: memref<8x16xf32, #tpu.memory_space<vmem>>, %arg5: memref<8x32xf32, #tpu.memory_space<vmem>>, %arg6: memref<8x1xf32, #tpu.memory_space<vmem>>, %arg7: memref<8x8xf32, #tpu.memory_space<vmem>>) attributes {dimension_semantics = [#tpu.dimension_semantics<parallel>], iteration_bounds = array<i64: 1>, scalar_prefetch = 0 : i64, scratch_operands = 0 : i64, tpu.core_type = #tpu.core_type<tc>, window_params = [{transform_indices = @transform_0, window_bounds = array<i64: 16, 8>}, {pipeline_mode = #tpu.pipeline_mode<synchronous>, transform_indices = @transform_1, window_bounds = array<i64: 32, 16>}, {pipeline_mode = #tpu.pipeline_mode<synchronous>, transform_indices = @transform_2, window_bounds = array<i64: 32, 1>}, {pipeline_mode = #tpu.pipeline_mode<synchronous>, transform_indices = @transform_3, window_bounds = array<i64: 8, 16>}, {pipeline_mode = #tpu.pipeline_mode<synchronous>, transform_indices = @transform_4, window_bounds = array<i64: 8, 32>}, {pipeline_mode = #tpu.pipeline_mode<synchronous>, transform_indices = @transform_5, window_bounds = array<i64: 8, 1>}, {transform_indices = @transform_6, window_bounds = array<i64: 8, 8>}]} {
    %c0 = arith.constant 0 : index
    %c0_0 = arith.constant 0 : index
    %0 = vector.load %arg1[%c0, %c0_0] : memref<16x8xf32, #tpu.memory_space<vmem>>, vector<16x8xf32>
    %c0_1 = arith.constant 0 : index
    %c0_2 = arith.constant 0 : index
    %1 = vector.load %arg2[%c0_1, %c0_2] : memref<32x16xf32, #tpu.memory_space<vmem>>, vector<32x16xf32>
    %cst = arith.constant dense<0.000000e+00> : vector<32x8xf32>
    %2 = tpu.matmul %1, %0, %cst {dimension_numbers = #tpu.dot_dimension_numbers<[1], [0], [0], [1], [0, 0, 1, 1], [], []>} : vector<32x16xf32>, vector<16x8xf32>, vector<32x8xf32> -> vector<32x8xf32>
    %c0_3 = arith.constant 0 : index
    %c0_4 = arith.constant 0 : index
    %3 = vector.load %arg3[%c0_3, %c0_4] : memref<32x1xf32, #tpu.memory_space<vmem>>, vector<32x1xf32>
    %4 = vector.broadcast %3 : vector<32x1xf32> to vector<32x8xf32>
    %5 = arith.addf %2, %4 : vector<32x8xf32>
    %cst_5 = arith.constant 0.000000e+00 : f32
    %6 = vector.broadcast %cst_5 : f32 to vector<32x8xf32>
    %7 = arith.maximumf %5, %6 : vector<32x8xf32>
    %c0_6 = arith.constant 0 : index
    %c0_7 = arith.constant 0 : index
    %8 = vector.load %arg5[%c0_6, %c0_7] : memref<8x32xf32, #tpu.memory_space<vmem>>, vector<8x32xf32>
    %cst_8 = arith.constant dense<0.000000e+00> : vector<8x8xf32>
    %9 = tpu.matmul %8, %7, %cst_8 {dimension_numbers = #tpu.dot_dimension_numbers<[1], [0], [0], [1], [0, 0, 1, 1], [], []>} : vector<8x32xf32>, vector<32x8xf32>, vector<8x8xf32> -> vector<8x8xf32>
    %c0_9 = arith.constant 0 : index
    %c0_10 = arith.constant 0 : index
    %10 = vector.load %arg4[%c0_9, %c0_10] : memref<8x16xf32, #tpu.memory_space<vmem>>, vector<8x16xf32>
    %cst_11 = arith.constant dense<0.000000e+00> : vector<8x8xf32>
    %11 = tpu.matmul %10, %0, %cst_11 {dimension_numbers = #tpu.dot_dimension_numbers<[1], [0], [0], [1], [0, 0, 1, 1], [], []>} : vector<8x16xf32>, vector<16x8xf32>, vector<8x8xf32> -> vector<8x8xf32>
    %12 = arith.addf %9, %11 : vector<8x8xf32>
    %c0_12 = arith.constant 0 : index
    %c0_13 = arith.constant 0 : index
    %13 = vector.load %arg6[%c0_12, %c0_13] : memref<8x1xf32, #tpu.memory_space<vmem>>, vector<8x1xf32>
    %14 = vector.broadcast %13 : vector<8x1xf32> to vector<8x8xf32>
    %15 = arith.addf %12, %14 : vector<8x8xf32>
    %c0_14 = arith.constant 0 : index
    %c0_15 = arith.constant 0 : index
    %16 = vector.load %arg7[%c0_14, %c0_15] : memref<8x8xf32, #tpu.memory_space<vmem>>, vector<8x8xf32>
    tpu.vector_store %arg7[%c0_14, %c0_15], %15 {strides = array<i32>} : memref<8x8xf32, #tpu.memory_space<vmem>>, vector<8x8xf32>,
    return
  }
  func.func @transform_0(%arg0: i32) -> (i32, i32) {
    %c0_i32 = arith.constant 0 : i32
    %c0_i32_0 = arith.constant 0 : i32
    return %c0_i32, %arg0 : i32, i32
  }
  func.func @transform_1(%arg0: i32) -> (i32, i32) {
    %c0_i32 = arith.constant 0 : i32
    %c0_i32_0 = arith.constant 0 : i32
    %c0_i32_1 = arith.constant 0 : i32
    return %c0_i32, %c0_i32_0 : i32, i32
  }
  func.func @transform_2(%arg0: i32) -> (i32, i32) {
    %c0_i32 = arith.constant 0 : i32
    %c0_i32_0 = arith.constant 0 : i32
    %c0_i32_1 = arith.constant 0 : i32
    return %c0_i32, %c0_i32_0 : i32, i32
  }
  func.func @transform_3(%arg0: i32) -> (i32, i32) {
    %c0_i32 = arith.constant 0 : i32
    %c0_i32_0 = arith.constant 0 : i32
    %c0_i32_1 = arith.constant 0 : i32
    return %c0_i32, %c0_i32_0 : i32, i32
  }
  func.func @transform_4(%arg0: i32) -> (i32, i32) {
    %c0_i32 = arith.constant 0 : i32
    %c0_i32_0 = arith.constant 0 : i32
    %c0_i32_1 = arith.constant 0 : i32
    return %c0_i32, %c0_i32_0 : i32, i32
  }
  func.func @transform_5(%arg0: i32) -> (i32, i32) {
    %c0_i32 = arith.constant 0 : i32
    %c0_i32_0 = arith.constant 0 : i32
    %c0_i32_1 = arith.constant 0 : i32
    return %c0_i32, %c0_i32_0 : i32, i32
  }
  func.func @transform_6(%arg0: i32) -> (i32, i32) {
    %c0_i32 = arith.constant 0 : i32
    %c0_i32_0 = arith.constant 0 : i32
    return %c0_i32, %arg0 : i32, i32
  }
}

module attributes {stable_mosaic.version = 11 : i64} {
  func.func @lassonet_kernel(%arg0: i32, %arg1: memref<16x8xf32, #tpu.memory_space<vmem>>, %arg2: memref<32x16xf32, #tpu.memory_space<vmem>>, %arg3: memref<32x1xf32, #tpu.memory_space<vmem>>, %arg4: memref<8x16xf32, #tpu.memory_space<vmem>>, %arg5: memref<8x32xf32, #tpu.memory_space<vmem>>, %arg6: memref<8x1xf32, #tpu.memory_space<vmem>>, %arg7: memref<8x8xf32, #tpu.memory_space<vmem>>) attributes {dimension_semantics = [#tpu.dimension_semantics<parallel>], iteration_bounds = array<i64: 1>, scalar_prefetch = 0 : i64, scratch_operands = 0 : i64, tpu.core_type = #tpu.core_type<tc>, window_params = [{transform_indices = @transform_0, window_bounds = array<i64: 16, 8>}, {pipeline_mode = #tpu.pipeline_mode<synchronous>, transform_indices = @transform_1, window_bounds = array<i64: 32, 16>}, {pipeline_mode = #tpu.pipeline_mode<synchronous>, transform_indices = @transform_2, window_bounds = array<i64: 32, 1>}, {pipeline_mode = #tpu.pipeline_mode<synchronous>, transform_indices = @transform_3, window_bounds = array<i64: 8, 16>}, {pipeline_mode = #tpu.pipeline_mode<synchronous>, transform_indices = @transform_4, window_bounds = array<i64: 8, 32>}, {pipeline_mode = #tpu.pipeline_mode<synchronous>, transform_indices = @transform_5, window_bounds = array<i64: 8, 1>}, {transform_indices = @transform_6, window_bounds = array<i64: 8, 8>}]} {
    %c0 = arith.constant 0 : index
    %c0_0 = arith.constant 0 : index
    %0 = vector.load %arg1[%c0, %c0_0] : memref<16x8xf32, #tpu.memory_space<vmem>>, vector<16x8xf32>
    %c0_1 = arith.constant 0 : index
    %c0_2 = arith.constant 0 : index
    %1 = vector.load %arg2[%c0_1, %c0_2] : memref<32x16xf32, #tpu.memory_space<vmem>>, vector<32x16xf32>
    %cst = arith.constant dense<0.000000e+00> : vector<32x8xf32>
    %2 = tpu.matmul %1, %0, %cst {dimension_numbers = #tpu.dot_dimension_numbers<[1], [0], [0], [1], [0, 0, 1, 1], [], []>} : vector<32x16xf32>, vector<16x8xf32>, vector<32x8xf32> -> vector<32x8xf32>
    %c0_3 = arith.constant 0 : index
    %c0_4 = arith.constant 0 : index
    %3 = vector.load %arg3[%c0_3, %c0_4] : memref<32x1xf32, #tpu.memory_space<vmem>>, vector<32x1xf32>
    %4 = vector.broadcast %3 : vector<32x1xf32> to vector<32x8xf32>
    %5 = arith.addf %2, %4 : vector<32x8xf32>
    %cst_5 = arith.constant 0.000000e+00 : f32
    %6 = vector.broadcast %cst_5 : f32 to vector<32x8xf32>
    %7 = arith.maximumf %5, %6 : vector<32x8xf32>
    %c0_6 = arith.constant 0 : index
    %c0_7 = arith.constant 0 : index
    %8 = vector.load %arg5[%c0_6, %c0_7] : memref<8x32xf32, #tpu.memory_space<vmem>>, vector<8x32xf32>
    %cst_8 = arith.constant dense<0.000000e+00> : vector<8x8xf32>
    %9 = tpu.matmul %8, %7, %cst_8 {dimension_numbers = #tpu.dot_dimension_numbers<[1], [0], [0], [1], [0, 0, 1, 1], [], []>} : vector<8x32xf32>, vector<32x8xf32>, vector<8x8xf32> -> vector<8x8xf32>
    %c0_9 = arith.constant 0 : index
    %c0_10 = arith.constant 0 : index
    %10 = vector.load %arg4[%c0_9, %c0_10] : memref<8x16xf32, #tpu.memory_space<vmem>>, vector<8x16xf32>
    %cst_11 = arith.constant dense<0.000000e+00> : vector<8x8xf32>
    %11 = tpu.matmul %10, %0, %cst_11 {dimension_numbers = #tpu.dot_dimension_numbers<[1], [0], [0], [1], [0, 0, 1, 1], [], []>} : vector<8x16xf32>, vector<16x8xf32>, vector<8x8xf32> -> vector<8x8xf32>
    %12 = arith.addf %9, %11 : vector<8x8xf32>
    %c0_12 = arith.constant 0 : index
    %c0_13 = arith.constant 0 : index
    %13 = vector.load %arg6[%c0_12, %c0_13] : memref<8x1xf32, #tpu.memory_space<vmem>>, vector<8x1xf32>
    %14 = vector.broadcast %13 : vector<8x1xf32> to vector<8x8xf32>
    %15 = arith.addf %12, %14 : vector<8x8xf32>
    %c0_14 = arith.constant 0 : index
    %c0_15 = arith.constant 0 : index
    %16 = vector.load %arg7[%c0_14, %c0_15] : memref<8x8xf32, #tpu.memory_space<vmem>>, vector<8x8xf32>
    tpu.vector_store %arg7[%c0_14, %c0_15], %15 {strides = array<i32>} : memref<8x8xf32, #tpu.memory_space<vmem>>, vector<8x8xf32>,
    return
  }
  func.func @transform_0(%arg0: i32) -> (i32, i32) {
    %c0_i32 = arith.constant 0 : i32
    %c0_i32_0 = arith.constant 0 : i32
    return %c0_i32, %arg0 : i32, i32
  }
  func.func @transform_1(%arg0: i32) -> (i32, i32) {
    %c0_i32 = arith.constant 0 : i32
    %c0_i32_0 = arith.constant 0 : i32
    %c0_i32_1 = arith.constant 0 : i32
    return %c0_i32, %c0_i32_0 : i32, i32
  }
  func.func @transform_2(%arg0: i32) -> (i32, i32) {
    %c0_i32 = arith.constant 0 : i32
    %c0_i32_0 = arith.constant 0 : i32
    %c0_i32_1 = arith.constant 0 : i32
    return %c0_i32, %c0_i32_0 : i32, i32
  }
  func.func @transform_3(%arg0: i32) -> (i32, i32) {
    %c0_i32 = arith.constant 0 : i32
    %c0_i32_0 = arith.constant 0 : i32
    %c0_i32_1 = arith.constant 0 : i32
    return %c0_i32, %c0_i32_0 : i32, i32
  }
  func.func @transform_4(%arg0: i32) -> (i32, i32) {
    %c0_i32 = arith.constant 0 : i32
    %c0_i32_0 = arith.constant 0 : i32
    %c0_i32_1 = arith.constant 0 : i32
    return %c0_i32, %c0_i32_0 : i32, i32
  }
  func.func @transform_5(%arg0: i32) -> (i32, i32) {
    %c0_i32 = arith.constant 0 : i32
    %c0_i32_0 = arith.constant 0 : i32
    %c0_i32_1 = arith.constant 0 : i32
    return %c0_i32, %c0_i32_0 : i32, i32
  }
  func.func @transform_6(%arg0: i32) -> (i32, i32) {
    %c0_i32 = arith.constant 0 : i32
    %c0_i32_0 = arith.constant 0 : i32
    return %c0_i32, %arg0 : i32, i32
  }
}

</mosaic_0001>

<llo_original>
// kernel: tpu_custom_call.1
$region0: #{tpu_custom_call.1}
  #allocation0 [shape = 'u32[]', space=smem, size = 0x4, offset = 0x4, fixed_abs, tag = 'smem constant byte address 0x4 - core index']
  #allocation1 [shape = 'u32[144,128]{1,0:T(1,128)}', space=vmem, size = 0x12000, scoped, tag = 'internal scratch']
  %s0 = inlined_call_operand.vmem [shape: f32[16,8], index: 0, kind: input, shape index: {}]
  %s1 = inlined_call_operand.vmem [shape: f32[32,16], index: 1, kind: input, shape index: {}]
  %s2 = inlined_call_operand.vmem [shape: f32[32,1], index: 2, kind: input, shape index: {}]
  %s3 = inlined_call_operand.vmem [shape: f32[8,16], index: 3, kind: input, shape index: {}]
  %s4 = inlined_call_operand.vmem [shape: f32[8,32], index: 4, kind: input, shape index: {}]
  %s5 = inlined_call_operand.vmem [shape: f32[8,1], index: 5, kind: input, shape index: {}]
  %s6 = inlined_call_operand.hbm [shape: f32[8,8], index: 6, kind: output, shape index: {}]
  %s7 = sld [smem:[#allocation0]]
  $region34: #{tpu_custom_call.1} parent=0
    _
  %s9 = ssub.s32 1, %s7
  %s10 = scalar_select 0, %s9, %s7
  $region1: #{tpu_custom_call.1} parent=0
    #allocation2 [shape = 'u8[4096]{0}', space=vmem, size = 0x1000, scoped, tag = 'output window, operand 0, single buffered']
    #allocation3 [shape = 's32[1]{0}', space=sflag, size = 0x4, scoped, tag = 'scoped memory for tpu_custom_call.1']
    %11 = vsyncpa [#allocation3], 0
    // Predicated region
    $region2: #{tpu_custom_call.1} parent=1 // pred_check
      _
    $region3: #{tpu_custom_call.1} parent=1 // pred_check_branch
      %13 = sbr.rel (0) target = $region5
    $region4: #{tpu_custom_call.1} parent=1 // pred_region
      _
    $region5: #{tpu_custom_call.1} parent=1 // pred_fallthru
      _
    // Predicated region
    $region6: #{tpu_custom_call.1} parent=1 // pred_check
      _
    $region7: #{tpu_custom_call.1} parent=1 // pred_check_branch
      %15 = sbr.rel (0) target = $region9
    $region8: #{tpu_custom_call.1} parent=1 // pred_region
      _
    $region9: #{tpu_custom_call.1} parent=1 // pred_fallthru
      _
    // Predicated region
    $region10: #{tpu_custom_call.1} parent=1 // pred_check
      _
    $region11: #{tpu_custom_call.1} parent=1 // pred_check_branch
      %17 = sbr.rel (0) target = $region13
    $region12: #{tpu_custom_call.1} parent=1 // pred_region
      _
    $region13: #{tpu_custom_call.1} parent=1 // pred_fallthru
      _
    // Predicated region
    $region14: #{tpu_custom_call.1} parent=1 // pred_check
      _
    $region15: #{tpu_custom_call.1} parent=1 // pred_check_branch
      %19 = sbr.rel (0) target = $region17
    $region16: #{tpu_custom_call.1} parent=1 // pred_region
      _
    $region17: #{tpu_custom_call.1} parent=1 // pred_fallthru
      _
    // Predicated region
    $region18: #{tpu_custom_call.1} parent=1 // pred_check
      _
    $region19: #{tpu_custom_call.1} parent=1 // pred_check_branch
      %21 = sbr.rel (0) target = $region21
    $region20: #{tpu_custom_call.1} parent=1 // pred_region
      _
    $region21: #{tpu_custom_call.1} parent=1 // pred_fallthru
      _
    // Predicated region
    $region22: #{tpu_custom_call.1} parent=1 // pred_check
      _
    $region23: #{tpu_custom_call.1} parent=1 // pred_check_branch
      %23 = sbr.rel (0) target = $region25
    $region24: #{tpu_custom_call.1} parent=1 // pred_region
      _
    $region25: #{tpu_custom_call.1} parent=1 // pred_fallthru
      _
    %v24 = vld [vmem:[%s0] sm:$0xff]
    %v25 = vld [vmem:[%s0 + $0x8] sm:$0xff]
    %v26 = vld [vmem:[%s1] sm:$0xff]
    %v27 = vld [vmem:[%s1 + $0x8] sm:$0xff]
    %v28 = vld [vmem:[%s1 + $0x10] sm:$0xff]
    %v29 = vld [vmem:[%s1 + $0x18] sm:$0xff]
    %v30 = vld [vmem:[%s2] sm:$0xff]
    %v31 = vld [vmem:[%s2 + $0x8] sm:$0xff]
    %v32 = vld [vmem:[%s2 + $0x10] sm:$0xff]
    %v33 = vld [vmem:[%s2 + $0x18] sm:$0xff]
    %35 = vset.pattern.permute.xlu0 0
    %36 = vperm.xlu0 %35, %v30
    %v37 = vpop.permute.xlu0 %36
    %40 = vset.pattern.permute.xlu0 0
    %41 = vperm.xlu0 %40, %v31
    %v42 = vpop.permute.xlu0 %41
    %45 = vset.pattern.permute.xlu0 0
    %46 = vperm.xlu0 %45, %v32
    %v47 = vpop.permute.xlu0 %46
    %50 = vset.pattern.permute.xlu0 0
    %51 = vperm.xlu0 %50, %v33
    %v52 = vpop.permute.xlu0 %51
    %vm54 = vcmask 130048
    %v56 = vsel %vm54, %v26, 0
    %v59 = vsel %vm54, %v27, 0
    %v62 = vsel %vm54, %v28, 0
    %v65 = vsel %vm54, %v29, 0
    %67 = vmatprep.subr.mxu0 0.0
    %68 = vmatpush1.msra.mxu0 0.0
    %69 = vmatprep.subr.mxu0 0.0
    %70 = vmatpush1.msra.mxu0 0.0
    %71 = vmatprep.subr.mxu0 0.0
    %72 = vmatpush1.msra.mxu0 0.0
    %73 = vmatprep.subr.mxu0 0.0
    %74 = vmatpush1.msra.mxu0 0.0
    %75 = vmatprep.subr.mxu0 0.0
    %76 = vmatpush1.msra.mxu0 0.0
    %77 = vmatprep.subr.mxu0 0.0
    %78 = vmatpush1.msra.mxu0 0.0
    %79 = vmatprep.subr.mxu0 0.0
    %80 = vmatpush1.msra.mxu0 0.0
    %81 = vmatprep.subr.mxu0 0.0
    %82 = vmatpush1.msra.mxu0 0.0
    %83 = vmatprep.subr.mxu0 0.0
    %84 = vmatpush1.msra.mxu0 0.0
    %85 = vmatprep.subr.mxu0 0.0
    %86 = vmatpush1.msra.mxu0 0.0
    %87 = vmatprep.subr.mxu0 0.0
    %88 = vmatpush1.msra.mxu0 0.0
    %89 = vmatprep.subr.mxu0 0.0
    %90 = vmatpush1.msra.mxu0 0.0
    %91 = vmatprep.subr.mxu0 0.0
    %92 = vmatpush1.msra.mxu0 0.0
    %93 = vmatprep.subr.mxu0 0.0
    %94 = vmatpush1.msra.mxu0 0.0
    %95 = vmatprep.subr.mxu0 0.0
    %96 = vmatpush1.msra.mxu0 %v25
    %97 = vmatprep.subr.mxu0 0.0
    %98 = vmatpush1.msra.mxu0 %v24
    %99 = vmatprep.subr.mxu0 0.0
    %100 = vmatpush2.msra.mxu0 0.0
    %101 = vmatprep.subr.mxu0 0.0
    %102 = vmatpush2.msra.mxu0 0.0
    %103 = vmatprep.subr.mxu0 0.0
    %104 = vmatpush2.msra.mxu0 0.0
    %105 = vmatprep.subr.mxu0 0.0
    %106 = vmatpush2.msra.mxu0 0.0
    %107 = vmatprep.subr.mxu0 0.0
    %108 = vmatpush2.msra.mxu0 0.0
    %109 = vmatprep.subr.mxu0 0.0
    %110 = vmatpush2.msra.mxu0 0.0
    %111 = vmatprep.subr.mxu0 0.0
    %112 = vmatpush2.msra.mxu0 0.0
    %113 = vmatprep.subr.mxu0 0.0
    %114 = vmatpush2.msra.mxu0 0.0
    %115 = vmatprep.subr.mxu0 0.0
    %116 = vmatpush2.msra.mxu0 0.0
    %117 = vmatprep.subr.mxu0 0.0
    %118 = vmatpush2.msra.mxu0 0.0
    %119 = vmatprep.subr.mxu0 0.0
    %120 = vmatpush2.msra.mxu0 0.0
    %121 = vmatprep.subr.mxu0 0.0
    %122 = vmatpush2.msra.mxu0 0.0
    %123 = vmatprep.subr.mxu0 0.0
    %124 = vmatpush2.msra.mxu0 0.0
    %125 = vmatprep.subr.mxu0 0.0
    %126 = vmatpush2.msra.mxu0 0.0
    %127 = vmatprep.subr.mxu0 0.0
    %128 = vmatpush2.msra.mxu0 0.0
    %129 = vmatprep.subr.mxu0 0.0
    %130 = vmatpush2.msra.mxu0 0.0
    %131 = vmatprep.mubr.f32.mxu0 0.0
    %132 = vmatmul.mubr.f32.gmra.mxu0 %v56
    %v133 = vpop.f32.mrf.mxu0
    %v134 = vadd.f32 %v37, %v133
    %v135 = vpop.f32.mrf.mxu0
    %136 = vmatprep.mubr.f32.mxu0 0.0
    %137 = vmatmul.mubr.f32.gmra.mxu0 %v59
    %v138 = vpop.f32.mrf.mxu0
    %v139 = vadd.f32 %v42, %v138
    %v140 = vpop.f32.mrf.mxu0
    %141 = vmatprep.mubr.f32.mxu0 0.0
    %142 = vmatmul.mubr.f32.gmra.mxu0 %v62
    %v143 = vpop.f32.mrf.mxu0
    %v144 = vadd.f32 %v47, %v143
    %v145 = vpop.f32.mrf.mxu0
    %146 = vmatprep.mubr.f32.mxu0 0.0
    %147 = vmatmul.mubr.f32.gmra.mxu0 %v65
    %v148 = vpop.f32.mrf.mxu0
    %v149 = vadd.f32 %v52, %v148
    %v150 = vpop.f32.mrf.mxu0
    %151 = vdwg.mxu0
    %v152 = vmax.f32 %v134, 0.0
    %v153 = vmax.f32 %v139, 0.0
    %v154 = vmax.f32 %v144, 0.0
    %v155 = vmax.f32 %v149, 0.0
    %v156 = vld [vmem:[%s4] sm:$0xff]
    %v157 = vld [vmem:[%s3] sm:$0xff]
    %v159 = vsel %vm54, %v157, 0
    %161 = vmatprep.subr.mxu0 0.0
    %162 = vmatpush1.msra.mxu0 0.0
    %163 = vmatprep.subr.mxu0 0.0
    %164 = vmatpush1.msra.mxu0 0.0
    %165 = vmatprep.subr.mxu0 0.0
    %166 = vmatpush1.msra.mxu0 0.0
    %167 = vmatprep.subr.mxu0 0.0
    %168 = vmatpush1.msra.mxu0 0.0
    %169 = vmatprep.subr.mxu0 0.0
    %170 = vmatpush1.msra.mxu0 0.0
    %171 = vmatprep.subr.mxu0 0.0
    %172 = vmatpush1.msra.mxu0 0.0
    %173 = vmatprep.subr.mxu0 0.0
    %174 = vmatpush1.msra.mxu0 0.0
    %175 = vmatprep.subr.mxu0 0.0
    %176 = vmatpush1.msra.mxu0 0.0
    %177 = vmatprep.subr.mxu0 0.0
    %178 = vmatpush1.msra.mxu0 0.0
    %179 = vmatprep.subr.mxu0 0.0
    %180 = vmatpush1.msra.mxu0 0.0
    %181 = vmatprep.subr.mxu0 0.0
    %182 = vmatpush1.msra.mxu0 0.0
    %183 = vmatprep.subr.mxu0 0.0
    %184 = vmatpush1.msra.mxu0 0.0
    %185 = vmatprep.subr.mxu0 0.0
    %186 = vmatpush1.msra.mxu0 0.0
    %187 = vmatprep.subr.mxu0 0.0
    %188 = vmatpush1.msra.mxu0 0.0
    %189 = vmatprep.subr.mxu0 0.0
    %190 = vmatpush1.msra.mxu0 %v25
    %191 = vmatprep.subr.mxu0 0.0
    %192 = vmatpush1.msra.mxu0 %v24
    %193 = vmatprep.subr.mxu0 0.0
    %194 = vmatpush2.msra.mxu0 0.0
    %195 = vmatprep.subr.mxu0 0.0
    %196 = vmatpush2.msra.mxu0 0.0
    %197 = vmatprep.subr.mxu0 0.0
    %198 = vmatpush2.msra.mxu0 0.0
    %199 = vmatprep.subr.mxu0 0.0
    %200 = vmatpush2.msra.mxu0 0.0
    %201 = vmatprep.subr.mxu0 0.0
    %202 = vmatpush2.msra.mxu0 0.0
    %203 = vmatprep.subr.mxu0 0.0
    %204 = vmatpush2.msra.mxu0 0.0
    %205 = vmatprep.subr.mxu0 0.0
    %206 = vmatpush2.msra.mxu0 0.0
    %207 = vmatprep.subr.mxu0 0.0
    %208 = vmatpush2.msra.mxu0 0.0
    %209 = vmatprep.subr.mxu0 0.0
    %210 = vmatpush2.msra.mxu0 0.0
    %211 = vmatprep.subr.mxu0 0.0
    %212 = vmatpush2.msra.mxu0 0.0
    %213 = vmatprep.subr.mxu0 0.0
    %214 = vmatpush2.msra.mxu0 0.0
    %215 = vmatprep.subr.mxu0 0.0
    %216 = vmatpush2.msra.mxu0 0.0
    %217 = vmatprep.subr.mxu0 0.0
    %218 = vmatpush2.msra.mxu0 0.0
    %219 = vmatprep.subr.mxu0 0.0
    %220 = vmatpush2.msra.mxu0 0.0
    %221 = vmatprep.subr.mxu0 0.0
    %222 = vmatpush2.msra.mxu0 0.0
    %223 = vmatprep.subr.mxu0 0.0
    %224 = vmatpush2.msra.mxu0 0.0
    %225 = vmatprep.mubr.f32.mxu0 0.0
    %226 = vmatmul.mubr.f32.gmra.mxu0 %v159
    %v227 = vpop.f32.mrf.mxu0
    %v228 = vadd.f32 0.0, %v227
    %v229 = vpop.f32.mrf.mxu0
    %230 = vdwg.mxu0
    %vm231 = vcmask 261120
    %v233 = vsel %vm231, %v156, 0
    %235 = vmatprep.subr.mxu0 0.0
    %236 = vmatpush1.msra.mxu0 0.0
    %237 = vmatprep.subr.mxu0 0.0
    %238 = vmatpush1.msra.mxu0 0.0
    %239 = vmatprep.subr.mxu0 0.0
    %240 = vmatpush1.msra.mxu0 0.0
    %241 = vmatprep.subr.mxu0 0.0
    %242 = vmatpush1.msra.mxu0 0.0
    %243 = vmatprep.subr.mxu0 0.0
    %244 = vmatpush1.msra.mxu0 0.0
    %245 = vmatprep.subr.mxu0 0.0
    %246 = vmatpush1.msra.mxu0 0.0
    %247 = vmatprep.subr.mxu0 0.0
    %248 = vmatpush1.msra.mxu0 0.0
    %249 = vmatprep.subr.mxu0 0.0
    %250 = vmatpush1.msra.mxu0 0.0
    %251 = vmatprep.subr.mxu0 0.0
    %252 = vmatpush1.msra.mxu0 0.0
    %253 = vmatprep.subr.mxu0 0.0
    %254 = vmatpush1.msra.mxu0 0.0
    %255 = vmatprep.subr.mxu0 0.0
    %256 = vmatpush1.msra.mxu0 0.0
    %257 = vmatprep.subr.mxu0 0.0
    %258 = vmatpush1.msra.mxu0 0.0
    %259 = vmatprep.subr.mxu0 0.0
    %260 = vmatpush1.msra.mxu0 %v155
    %261 = vmatprep.subr.mxu0 0.0
    %262 = vmatpush1.msra.mxu0 %v154
    %263 = vmatprep.subr.mxu0 0.0
    %264 = vmatpush1.msra.mxu0 %v153
    %265 = vmatprep.subr.mxu0 0.0
    %266 = vmatpush1.msra.mxu0 %v152
    %267 = vmatprep.subr.mxu0 0.0
    %268 = vmatpush2.msra.mxu0 0.0
    %269 = vmatprep.subr.mxu0 0.0
    %270 = vmatpush2.msra.mxu0 0.0
    %271 = vmatprep.subr.mxu0 0.0
    %272 = vmatpush2.msra.mxu0 0.0
    %273 = vmatprep.subr.mxu0 0.0
    %274 = vmatpush2.msra.mxu0 0.0
    %275 = vmatprep.subr.mxu0 0.0
    %276 = vmatpush2.msra.mxu0 0.0
    %277 = vmatprep.subr.mxu0 0.0
    %278 = vmatpush2.msra.mxu0 0.0
    %279 = vmatprep.subr.mxu0 0.0
    %280 = vmatpush2.msra.mxu0 0.0
    %281 = vmatprep.subr.mxu0 0.0
    %282 = vmatpush2.msra.mxu0 0.0
    %283 = vmatprep.subr.mxu0 0.0
    %284 = vmatpush2.msra.mxu0 0.0
    %285 = vmatprep.subr.mxu0 0.0
    %286 = vmatpush2.msra.mxu0 0.0
    %287 = vmatprep.subr.mxu0 0.0
    %288 = vmatpush2.msra.mxu0 0.0
    %289 = vmatprep.subr.mxu0 0.0
    %290 = vmatpush2.msra.mxu0 0.0
    %291 = vmatprep.subr.mxu0 0.0
    %292 = vmatpush2.msra.mxu0 0.0
    %293 = vmatprep.subr.mxu0 0.0
    %294 = vmatpush2.msra.mxu0 0.0
    %295 = vmatprep.subr.mxu0 0.0
    %296 = vmatpush2.msra.mxu0 0.0
    %297 = vmatprep.subr.mxu0 0.0
    %298 = vmatpush2.msra.mxu0 0.0
    %299 = vmatprep.mubr.f32.mxu0 0.0
    %300 = vmatmul.mubr.f32.gmra.mxu0 %v233
    %v301 = vpop.f32.mrf.mxu0
    %v302 = vadd.f32 %v228, %v301
    %v303 = vpop.f32.mrf.mxu0
    %304 = vdwg.mxu0
    %v305 = vld [vmem:[%s5] sm:$0xff]
    %307 = vset.pattern.permute.xlu0 0
    %308 = vperm.xlu0 %307, %v305
    %v309 = vpop.permute.xlu0 %308
    %v311 = vadd.f32 %v302, %v309
    %vm312 = vcmask 64512
    %313 = vst.msk [vmem:[#allocation2] sm:$0xff] %vm312, %v311
    // Predicated region
    $region26: #{tpu_custom_call.1} parent=1 // pred_check
      _
    $region27: #{tpu_custom_call.1} parent=1 // pred_check_branch
      %315 = sbr.rel (0) target = $region29
    $region28: #{tpu_custom_call.1} parent=1 // pred_region
      %s317 = ssub.s32 128, 128
      %318 = vsyncadd [#allocation3], %s317
      %s320 = sshll.u32 [#allocation2], 4
      %s321 = int_to_ptr.vmem [resolvable:$true] %s320
      %323 = dma.vmem_to_hbm [thread:$0]  %s321, 128, %s6, [#allocation3]
    $region29: #{tpu_custom_call.1} parent=1 // pred_fallthru
      _
    // Predicated region
    $region30: #{tpu_custom_call.1} parent=1 // pred_check
      _
    $region31: #{tpu_custom_call.1} parent=1 // pred_check_branch
      %325 = sbr.rel (0) target = $region33
    $region32: #{tpu_custom_call.1} parent=1 // pred_region
      %326 = dma.done [#allocation3], 128
    $region33: #{tpu_custom_call.1} parent=1 // pred_fallthru
      _
    %327 = vsyncpa [#allocation3], 1

// kernel: tpu_custom_call.1
$region0: #{tpu_custom_call.1}
  #allocation0 [shape = 'u32[]', space=smem, size = 0x4, offset = 0x4, fixed_abs, tag = 'smem constant byte address 0x4 - core index']
  #allocation1 [shape = 'u32[144,128]{1,0:T(1,128)}', space=vmem, size = 0x12000, scoped, tag = 'internal scratch']
  %s0 = inlined_call_operand.vmem [shape: f32[16,8], index: 0, kind: input, shape index: {}]
  %s1 = inlined_call_operand.vmem [shape: f32[32,16], index: 1, kind: input, shape index: {}]
  %s2 = inlined_call_operand.vmem [shape: f32[32,1], index: 2, kind: input, shape index: {}]
  %s3 = inlined_call_operand.vmem [shape: f32[8,16], index: 3, kind: input, shape index: {}]
  %s4 = inlined_call_operand.vmem [shape: f32[8,32], index: 4, kind: input, shape index: {}]
  %s5 = inlined_call_operand.vmem [shape: f32[8,1], index: 5, kind: input, shape index: {}]
  %s6 = inlined_call_operand.hbm [shape: f32[8,8], index: 6, kind: output, shape index: {}]
  %s7 = sld [smem:[#allocation0]]
  $region34: #{tpu_custom_call.1} parent=0
    _
  %s9 = ssub.s32 1, %s7
  %s10 = scalar_select 0, %s9, %s7
  $region1: #{tpu_custom_call.1} parent=0
    #allocation2 [shape = 'u8[4096]{0}', space=vmem, size = 0x1000, scoped, tag = 'output window, operand 0, single buffered']
    #allocation3 [shape = 's32[1]{0}', space=sflag, size = 0x4, scoped, tag = 'scoped memory for tpu_custom_call.1']
    %11 = vsyncpa [#allocation3], 0
    // Predicated region
    $region2: #{tpu_custom_call.1} parent=1 // pred_check
      _
    $region3: #{tpu_custom_call.1} parent=1 // pred_check_branch
      %13 = sbr.rel (0) target = $region5
    $region4: #{tpu_custom_call.1} parent=1 // pred_region
      _
    $region5: #{tpu_custom_call.1} parent=1 // pred_fallthru
      _
    // Predicated region
    $region6: #{tpu_custom_call.1} parent=1 // pred_check
      _
    $region7: #{tpu_custom_call.1} parent=1 // pred_check_branch
      %15 = sbr.rel (0) target = $region9
    $region8: #{tpu_custom_call.1} parent=1 // pred_region
      _
    $region9: #{tpu_custom_call.1} parent=1 // pred_fallthru
      _
    // Predicated region
    $region10: #{tpu_custom_call.1} parent=1 // pred_check
      _
    $region11: #{tpu_custom_call.1} parent=1 // pred_check_branch
      %17 = sbr.rel (0) target = $region13
    $region12: #{tpu_custom_call.1} parent=1 // pred_region
      _
    $region13: #{tpu_custom_call.1} parent=1 // pred_fallthru
      _
    // Predicated region
    $region14: #{tpu_custom_call.1} parent=1 // pred_check
      _
    $region15: #{tpu_custom_call.1} parent=1 // pred_check_branch
      %19 = sbr.rel (0) target = $region17
    $region16: #{tpu_custom_call.1} parent=1 // pred_region
      _
    $region17: #{tpu_custom_call.1} parent=1 // pred_fallthru
      _
    // Predicated region
    $region18: #{tpu_custom_call.1} parent=1 // pred_check
      _
    $region19: #{tpu_custom_call.1} parent=1 // pred_check_branch
      %21 = sbr.rel (0) target = $region21
    $region20: #{tpu_custom_call.1} parent=1 // pred_region
      _
    $region21: #{tpu_custom_call.1} parent=1 // pred_fallthru
      _
    // Predicated region
    $region22: #{tpu_custom_call.1} parent=1 // pred_check
      _
    $region23: #{tpu_custom_call.1} parent=1 // pred_check_branch
      %23 = sbr.rel (0) target = $region25
    $region24: #{tpu_custom_call.1} parent=1 // pred_region
      _
    $region25: #{tpu_custom_call.1} parent=1 // pred_fallthru
      _
    %v24 = vld [vmem:[%s0] sm:$0xff]
    %v25 = vld [vmem:[%s0 + $0x8] sm:$0xff]
    %v26 = vld [vmem:[%s1] sm:$0xff]
    %v27 = vld [vmem:[%s1 + $0x8] sm:$0xff]
    %v28 = vld [vmem:[%s1 + $0x10] sm:$0xff]
    %v29 = vld [vmem:[%s1 + $0x18] sm:$0xff]
    %v30 = vld [vmem:[%s2] sm:$0xff]
    %v31 = vld [vmem:[%s2 + $0x8] sm:$0xff]
    %v32 = vld [vmem:[%s2 + $0x10] sm:$0xff]
    %v33 = vld [vmem:[%s2 + $0x18] sm:$0xff]
    %35 = vset.pattern.permute.xlu0 0
    %36 = vperm.xlu0 %35, %v30
    %v37 = vpop.permute.xlu0 %36
    %40 = vset.pattern.permute.xlu0 0
    %41 = vperm.xlu0 %40, %v31
    %v42 = vpop.permute.xlu0 %41
    %45 = vset.pattern.permute.xlu0 0
    %46 = vperm.xlu0 %45, %v32
    %v47 = vpop.permute.xlu0 %46
    %50 = vset.pattern.permute.xlu0 0
    %51 = vperm.xlu0 %50, %v33
    %v52 = vpop.permute.xlu0 %51
    %vm54 = vcmask 130048
    %v56 = vsel %vm54, %v26, 0
    %v59 = vsel %vm54, %v27, 0
    %v62 = vsel %vm54, %v28, 0
    %v65 = vsel %vm54, %v29, 0
    %67 = vmatprep.subr.mxu0 0.0
    %68 = vmatpush1.msra.mxu0 0.0
    %69 = vmatprep.subr.mxu0 0.0
    %70 = vmatpush1.msra.mxu0 0.0
    %71 = vmatprep.subr.mxu0 0.0
    %72 = vmatpush1.msra.mxu0 0.0
    %73 = vmatprep.subr.mxu0 0.0
    %74 = vmatpush1.msra.mxu0 0.0
    %75 = vmatprep.subr.mxu0 0.0
    %76 = vmatpush1.msra.mxu0 0.0
    %77 = vmatprep.subr.mxu0 0.0
    %78 = vmatpush1.msra.mxu0 0.0
    %79 = vmatprep.subr.mxu0 0.0
    %80 = vmatpush1.msra.mxu0 0.0
    %81 = vmatprep.subr.mxu0 0.0
    %82 = vmatpush1.msra.mxu0 0.0
    %83 = vmatprep.subr.mxu0 0.0
    %84 = vmatpush1.msra.mxu0 0.0
    %85 = vmatprep.subr.mxu0 0.0
    %86 = vmatpush1.msra.mxu0 0.0
    %87 = vmatprep.subr.mxu0 0.0
    %88 = vmatpush1.msra.mxu0 0.0
    %89 = vmatprep.subr.mxu0 0.0
    %90 = vmatpush1.msra.mxu0 0.0
    %91 = vmatprep.subr.mxu0 0.0
    %92 = vmatpush1.msra.mxu0 0.0
    %93 = vmatprep.subr.mxu0 0.0
    %94 = vmatpush1.msra.mxu0 0.0
    %95 = vmatprep.subr.mxu0 0.0
    %96 = vmatpush1.msra.mxu0 %v25
    %97 = vmatprep.subr.mxu0 0.0
    %98 = vmatpush1.msra.mxu0 %v24
    %99 = vmatprep.subr.mxu0 0.0
    %100 = vmatpush2.msra.mxu0 0.0
    %101 = vmatprep.subr.mxu0 0.0
    %102 = vmatpush2.msra.mxu0 0.0
    %103 = vmatprep.subr.mxu0 0.0
    %104 = vmatpush2.msra.mxu0 0.0
    %105 = vmatprep.subr.mxu0 0.0
    %106 = vmatpush2.msra.mxu0 0.0
    %107 = vmatprep.subr.mxu0 0.0
    %108 = vmatpush2.msra.mxu0 0.0
    %109 = vmatprep.subr.mxu0 0.0
    %110 = vmatpush2.msra.mxu0 0.0
    %111 = vmatprep.subr.mxu0 0.0
    %112 = vmatpush2.msra.mxu0 0.0
    %113 = vmatprep.subr.mxu0 0.0
    %114 = vmatpush2.msra.mxu0 0.0
    %115 = vmatprep.subr.mxu0 0.0
    %116 = vmatpush2.msra.mxu0 0.0
    %117 = vmatprep.subr.mxu0 0.0
    %118 = vmatpush2.msra.mxu0 0.0
    %119 = vmatprep.subr.mxu0 0.0
    %120 = vmatpush2.msra.mxu0 0.0
    %121 = vmatprep.subr.mxu0 0.0
    %122 = vmatpush2.msra.mxu0 0.0
    %123 = vmatprep.subr.mxu0 0.0
    %124 = vmatpush2.msra.mxu0 0.0
    %125 = vmatprep.subr.mxu0 0.0
    %126 = vmatpush2.msra.mxu0 0.0
    %127 = vmatprep.subr.mxu0 0.0
    %128 = vmatpush2.msra.mxu0 0.0
    %129 = vmatprep.subr.mxu0 0.0
    %130 = vmatpush2.msra.mxu0 0.0
    %131 = vmatprep.mubr.f32.mxu0 0.0
    %132 = vmatmul.mubr.f32.gmra.mxu0 %v56
    %v133 = vpop.f32.mrf.mxu0
    %v134 = vadd.f32 %v37, %v133
    %v135 = vpop.f32.mrf.mxu0
    %136 = vmatprep.mubr.f32.mxu0 0.0
    %137 = vmatmul.mubr.f32.gmra.mxu0 %v59
    %v138 = vpop.f32.mrf.mxu0
    %v139 = vadd.f32 %v42, %v138
    %v140 = vpop.f32.mrf.mxu0
    %141 = vmatprep.mubr.f32.mxu0 0.0
    %142 = vmatmul.mubr.f32.gmra.mxu0 %v62
    %v143 = vpop.f32.mrf.mxu0
    %v144 = vadd.f32 %v47, %v143
    %v145 = vpop.f32.mrf.mxu0
    %146 = vmatprep.mubr.f32.mxu0 0.0
    %147 = vmatmul.mubr.f32.gmra.mxu0 %v65
    %v148 = vpop.f32.mrf.mxu0
    %v149 = vadd.f32 %v52, %v148
    %v150 = vpop.f32.mrf.mxu0
    %151 = vdwg.mxu0
    %v152 = vmax.f32 %v134, 0.0
    %v153 = vmax.f32 %v139, 0.0
    %v154 = vmax.f32 %v144, 0.0
    %v155 = vmax.f32 %v149, 0.0
    %v156 = vld [vmem:[%s4] sm:$0xff]
    %v157 = vld [vmem:[%s3] sm:$0xff]
    %v159 = vsel %vm54, %v157, 0
    %161 = vmatprep.subr.mxu0 0.0
    %162 = vmatpush1.msra.mxu0 0.0
    %163 = vmatprep.subr.mxu0 0.0
    %164 = vmatpush1.msra.mxu0 0.0
    %165 = vmatprep.subr.mxu0 0.0
    %166 = vmatpush1.msra.mxu0 0.0
    %167 = vmatprep.subr.mxu0 0.0
    %168 = vmatpush1.msra.mxu0 0.0
    %169 = vmatprep.subr.mxu0 0.0
    %170 = vmatpush1.msra.mxu0 0.0
    %171 = vmatprep.subr.mxu0 0.0
    %172 = vmatpush1.msra.mxu0 0.0
    %173 = vmatprep.subr.mxu0 0.0
    %174 = vmatpush1.msra.mxu0 0.0
    %175 = vmatprep.subr.mxu0 0.0
    %176 = vmatpush1.msra.mxu0 0.0
    %177 = vmatprep.subr.mxu0 0.0
    %178 = vmatpush1.msra.mxu0 0.0
    %179 = vmatprep.subr.mxu0 0.0
    %180 = vmatpush1.msra.mxu0 0.0
    %181 = vmatprep.subr.mxu0 0.0
    %182 = vmatpush1.msra.mxu0 0.0
    %183 = vmatprep.subr.mxu0 0.0
    %184 = vmatpush1.msra.mxu0 0.0
    %185 = vmatprep.subr.mxu0 0.0
    %186 = vmatpush1.msra.mxu0 0.0
    %187 = vmatprep.subr.mxu0 0.0
    %188 = vmatpush1.msra.mxu0 0.0
    %189 = vmatprep.subr.mxu0 0.0
    %190 = vmatpush1.msra.mxu0 %v25
    %191 = vmatprep.subr.mxu0 0.0
    %192 = vmatpush1.msra.mxu0 %v24
    %193 = vmatprep.subr.mxu0 0.0
    %194 = vmatpush2.msra.mxu0 0.0
    %195 = vmatprep.subr.mxu0 0.0
    %196 = vmatpush2.msra.mxu0 0.0
    %197 = vmatprep.subr.mxu0 0.0
    %198 = vmatpush2.msra.mxu0 0.0
    %199 = vmatprep.subr.mxu0 0.0
    %200 = vmatpush2.msra.mxu0 0.0
    %201 = vmatprep.subr.mxu0 0.0
    %202 = vmatpush2.msra.mxu0 0.0
    %203 = vmatprep.subr.mxu0 0.0
    %204 = vmatpush2.msra.mxu0 0.0
    %205 = vmatprep.subr.mxu0 0.0
    %206 = vmatpush2.msra.mxu0 0.0
    %207 = vmatprep.subr.mxu0 0.0
    %208 = vmatpush2.msra.mxu0 0.0
    %209 = vmatprep.subr.mxu0 0.0
    %210 = vmatpush2.msra.mxu0 0.0
    %211 = vmatprep.subr.mxu0 0.0
    %212 = vmatpush2.msra.mxu0 0.0
    %213 = vmatprep.subr.mxu0 0.0
    %214 = vmatpush2.msra.mxu0 0.0
    %215 = vmatprep.subr.mxu0 0.0
    %216 = vmatpush2.msra.mxu0 0.0
    %217 = vmatprep.subr.mxu0 0.0
    %218 = vmatpush2.msra.mxu0 0.0
    %219 = vmatprep.subr.mxu0 0.0
    %220 = vmatpush2.msra.mxu0 0.0
    %221 = vmatprep.subr.mxu0 0.0
    %222 = vmatpush2.msra.mxu0 0.0
    %223 = vmatprep.subr.mxu0 0.0
    %224 = vmatpush2.msra.mxu0 0.0
    %225 = vmatprep.mubr.f32.mxu0 0.0
    %226 = vmatmul.mubr.f32.gmra.mxu0 %v159
    %v227 = vpop.f32.mrf.mxu0
    %v228 = vadd.f32 0.0, %v227
    %v229 = vpop.f32.mrf.mxu0
    %230 = vdwg.mxu0
    %vm231 = vcmask 261120
    %v233 = vsel %vm231, %v156, 0
    %235 = vmatprep.subr.mxu0 0.0
    %236 = vmatpush1.msra.mxu0 0.0
    %237 = vmatprep.subr.mxu0 0.0
    %238 = vmatpush1.msra.mxu0 0.0
    %239 = vmatprep.subr.mxu0 0.0
    %240 = vmatpush1.msra.mxu0 0.0
    %241 = vmatprep.subr.mxu0 0.0
    %242 = vmatpush1.msra.mxu0 0.0
    %243 = vmatprep.subr.mxu0 0.0
    %244 = vmatpush1.msra.mxu0 0.0
    %245 = vmatprep.subr.mxu0 0.0
    %246 = vmatpush1.msra.mxu0 0.0
    %247 = vmatprep.subr.mxu0 0.0
    %248 = vmatpush1.msra.mxu0 0.0
    %249 = vmatprep.subr.mxu0 0.0
    %250 = vmatpush1.msra.mxu0 0.0
    %251 = vmatprep.subr.mxu0 0.0
    %252 = vmatpush1.msra.mxu0 0.0
    %253 = vmatprep.subr.mxu0 0.0
    %254 = vmatpush1.msra.mxu0 0.0
    %255 = vmatprep.subr.mxu0 0.0
    %256 = vmatpush1.msra.mxu0 0.0
    %257 = vmatprep.subr.mxu0 0.0
    %258 = vmatpush1.msra.mxu0 0.0
    %259 = vmatprep.subr.mxu0 0.0
    %260 = vmatpush1.msra.mxu0 %v155
    %261 = vmatprep.subr.mxu0 0.0
    %262 = vmatpush1.msra.mxu0 %v154
    %263 = vmatprep.subr.mxu0 0.0
    %264 = vmatpush1.msra.mxu0 %v153
    %265 = vmatprep.subr.mxu0 0.0
    %266 = vmatpush1.msra.mxu0 %v152
    %267 = vmatprep.subr.mxu0 0.0
    %268 = vmatpush2.msra.mxu0 0.0
    %269 = vmatprep.subr.mxu0 0.0
    %270 = vmatpush2.msra.mxu0 0.0
    %271 = vmatprep.subr.mxu0 0.0
    %272 = vmatpush2.msra.mxu0 0.0
    %273 = vmatprep.subr.mxu0 0.0
    %274 = vmatpush2.msra.mxu0 0.0
    %275 = vmatprep.subr.mxu0 0.0
    %276 = vmatpush2.msra.mxu0 0.0
    %277 = vmatprep.subr.mxu0 0.0
    %278 = vmatpush2.msra.mxu0 0.0
    %279 = vmatprep.subr.mxu0 0.0
    %280 = vmatpush2.msra.mxu0 0.0
    %281 = vmatprep.subr.mxu0 0.0
    %282 = vmatpush2.msra.mxu0 0.0
    %283 = vmatprep.subr.mxu0 0.0
    %284 = vmatpush2.msra.mxu0 0.0
    %285 = vmatprep.subr.mxu0 0.0
    %286 = vmatpush2.msra.mxu0 0.0
    %287 = vmatprep.subr.mxu0 0.0
    %288 = vmatpush2.msra.mxu0 0.0
    %289 = vmatprep.subr.mxu0 0.0
    %290 = vmatpush2.msra.mxu0 0.0
    %291 = vmatprep.subr.mxu0 0.0
    %292 = vmatpush2.msra.mxu0 0.0
    %293 = vmatprep.subr.mxu0 0.0
    %294 = vmatpush2.msra.mxu0 0.0
    %295 = vmatprep.subr.mxu0 0.0
    %296 = vmatpush2.msra.mxu0 0.0
    %297 = vmatprep.subr.mxu0 0.0
    %298 = vmatpush2.msra.mxu0 0.0
    %299 = vmatprep.mubr.f32.mxu0 0.0
    %300 = vmatmul.mubr.f32.gmra.mxu0 %v233
    %v301 = vpop.f32.mrf.mxu0
    %v302 = vadd.f32 %v228, %v301
    %v303 = vpop.f32.mrf.mxu0
    %304 = vdwg.mxu0
    %v305 = vld [vmem:[%s5] sm:$0xff]
    %307 = vset.pattern.permute.xlu0 0
    %308 = vperm.xlu0 %307, %v305
    %v309 = vpop.permute.xlu0 %308
    %v311 = vadd.f32 %v302, %v309
    %vm312 = vcmask 64512
    %313 = vst.msk [vmem:[#allocation2] sm:$0xff] %vm312, %v311
    // Predicated region
    $region26: #{tpu_custom_call.1} parent=1 // pred_check
      _
    $region27: #{tpu_custom_call.1} parent=1 // pred_check_branch
      %315 = sbr.rel (0) target = $region29
    $region28: #{tpu_custom_call.1} parent=1 // pred_region
      %s317 = ssub.s32 128, 128
      %318 = vsyncadd [#allocation3], %s317
      %s320 = sshll.u32 [#allocation2], 4
      %s321 = int_to_ptr.vmem [resolvable:$true] %s320
      %323 = dma.vmem_to_hbm [thread:$0]  %s321, 128, %s6, [#allocation3]
    $region29: #{tpu_custom_call.1} parent=1 // pred_fallthru
      _
    // Predicated region
    $region30: #{tpu_custom_call.1} parent=1 // pred_check
      _
    $region31: #{tpu_custom_call.1} parent=1 // pred_check_branch
      %325 = sbr.rel (0) target = $region33
    $region32: #{tpu_custom_call.1} parent=1 // pred_region
      %326 = dma.done [#allocation3], 128
    $region33: #{tpu_custom_call.1} parent=1 // pred_fallthru
      _
    %327 = vsyncpa [#allocation3], 1

</llo_original>
